<compile_context>
chip_gen: v7x
topology: tpu7x:2x2x1
jax: 0.10.0
libtpu: 0.0.40
codegen_flags: <defaults>
</compile_context>

<pallas_src>
import functools

import jax
import jax.numpy as jnp
from jax.experimental import pallas as pl
from jax.experimental.pallas import tpu as pltpu


def _round_up(x, m):
    return (x + m - 1) // m * m


def _make_kernel(k, e_char, l_out):
    kk = k * e_char  # MXU contraction depth

    def kernel(x_ref, w_ref, b_ref, o_ref):
        # x_ref: (TN, m_pad*e_char) bf16  zero-padded chars, lane-dense
        # w_ref: (k*e_char, F_PAD)  bf16  resident, lane-padded output channels
        # b_ref: (1, F_PAD)         f32   resident
        # o_ref: (TN, F_PAD)        f32   relu(maxpool(conv) + b) for this word tile
        w = w_ref[...]
        result = None
        for t in range(l_out):                               # static unroll over positions
            window = x_ref[:, t * e_char:t * e_char + kk]    # (TN, k*e_char) bf16
            part = jnp.dot(window, w, preferred_element_type=jnp.float32)
            result = part if result is None else jnp.maximum(result, part)
        # bias + ReLU after the pool: max_t(conv_t + b) == max_t(conv_t) + b, ReLU monotone.
        o_ref[...] = jnp.maximum(result + b_ref[...], 0.0).astype(o_ref.dtype)

    return kernel


def cnn_forward(char_embeds, weight, bias, k=5, padding=1,
                block_words=512, compute_dtype=jnp.bfloat16):
    """char_embeds: (L, B, e_char, m_word) -> (L, B, f).  Matches PyTorch
    Conv1d(e_char, f, k, padding) -> ReLU -> MaxPool1d(full length)."""
    L, B, e_char, m_word = char_embeds.shape
    f = weight.shape[0]
    N = L * B
    l_out = m_word + 2 * padding - k + 1
    m_pad = m_word + 2 * padding
    f_pad = _round_up(f, 128)                 # lane-dense output stores
    kk = k * e_char

    # Word tile: big enough to amortize per-step overhead, but >= 2 grid steps
    # whenever N allows (v7x shards the "parallel" axis over its 2 TCs).
    tn = min(block_words, max(8, _round_up(-(-N // 2), 8)))
    n_pad = _round_up(N, tn)
    grid = (n_pad // tn,)

    # x: (L, B, e_char, m_word) -> (N_pad, m_pad*e_char) bf16 (lane-dense).
    # Cast first so the transpose/pad prologue moves bf16, not f32.
    x = char_embeds.astype(compute_dtype)
    x = jnp.transpose(x, (0, 1, 3, 2)).reshape(N, m_word, e_char)
    x = jnp.pad(x, ((0, n_pad - N), (padding, padding), (0, 0)))
    x = x.reshape(n_pad, m_pad * e_char)

    # weight: (f, e_char, k) -> (k*e_char, f_pad) with row index j*e_char + c == weight[:, c, j].
    w = jnp.transpose(weight, (2, 1, 0)).reshape(kk, f)
    w = jnp.pad(w, ((0, 0), (0, f_pad - f))).astype(compute_dtype)
    b = jnp.pad(bias.astype(jnp.float32), (0, f_pad - f)).reshape(1, f_pad)

    # VMEM budget: double-buffered x / out blocks + resident w/b + live temporaries.
    vmem_bytes = (2 * tn * m_pad * e_char * 2       # x blocks (bf16, 2 buffers)
                  + 2 * tn * f_pad * 4              # out blocks (f32, 2 buffers)
                  + 2 * kk * f_pad * 2              # resident weight
                  + 2 * f_pad * 4                   # resident bias
                  + tn * f_pad * 4 + tn * kk * 2)   # running max + one window
    vmem_limit = min(48 * 1024 * 1024, max(4 * 1024 * 1024, 2 * vmem_bytes))

    cost = pl.CostEstimate(
        flops=2 * n_pad * l_out * kk * f_pad,
        transcendentals=0,
        bytes_accessed=(x.size * x.dtype.itemsize
                        + w.size * w.dtype.itemsize
                        + b.size * 4
                        + n_pad * f_pad * 4),
    )

    out = pl.pallas_call(
        _make_kernel(k, e_char, l_out),
        out_shape=jax.ShapeDtypeStruct((n_pad, f_pad), jnp.float32),
        grid_spec=pltpu.PrefetchScalarGridSpec(
            num_scalar_prefetch=0,
            grid=grid,
            in_specs=[
                pl.BlockSpec((tn, m_pad * e_char), lambda i: (i, 0)),
                pl.BlockSpec((kk, f_pad), lambda i: (0, 0)),   # resident weight
                pl.BlockSpec((1, f_pad), lambda i: (0, 0)),    # resident bias
            ],
            out_specs=pl.BlockSpec((tn, f_pad), lambda i: (i, 0)),
        ),
        compiler_params=pltpu.CompilerParams(
            dimension_semantics=("parallel",),
            vmem_limit_bytes=vmem_limit,
        ),
        cost_estimate=cost,
    )(x, w, b)

    # TODO(synk): downstream consumers (highway / projection) could read the
    # padded (n_pad, f_pad) buffer — optionally in bf16 — to skip this slice.
    return out[:N, :f].reshape(L, B, f)


def _reference(char_embeds, weight, bias, k=5, padding=1):
    """Pure-JAX reference mirroring the PyTorch forward (f32 math)."""
    L, B, e_char, m_word = char_embeds.shape
    f = weight.shape[0]
    x = char_embeds.reshape(L * B, e_char, m_word)
    conv = jax.lax.conv_general_dilated(
        x, weight,
        window_strides=(1,),
        padding=[(padding, padding)],
        dimension_numbers=("NCH", "OIH", "NCH"),
    ) + bias[None, :, None]
    act = jnp.maximum(conv, 0.0)
    pooled = jnp.max(act, axis=-1)
    return pooled.reshape(L, B, f)


if __name__ == "__main__":
    # Small shapes consistent with the module's forward signature.
    max_sentence_length = 4
    batch_size = 2
    e_char = 8
    max_word_length = 16
    e_word = 32   # f (number of conv kernels)
    k = 5
    padding = 1

    key = jax.random.PRNGKey(0)
    k1, k2, k3 = jax.random.split(key, 3)
    char_embeds = jax.random.normal(
        k1, (max_sentence_length, batch_size, e_char, max_word_length), jnp.float32)
    # Conv1d parameters (PyTorch shape: (out_channels, in_channels, kernel_size))
    weight = jax.random.normal(k2, (e_word, e_char, k), jnp.float32) * 0.1
    bias = jax.random.normal(k3, (e_word,), jnp.float32) * 0.1

    fwd = jax.jit(functools.partial(cnn_forward, k=k, padding=padding))
    out = fwd(char_embeds, weight, bias)
    out = jax.block_until_ready(out)

    # Reference on the same bf16-rounded inputs (kernel feeds bf16 to the MXU,
    # accumulates in f32), so only summation-order noise remains.
    ce_r = char_embeds.astype(jnp.bfloat16).astype(jnp.float32)
    w_r = weight.astype(jnp.bfloat16).astype(jnp.float32)
    ref = _reference(ce_r, w_r, bias, k=k, padding=padding)

    assert out.shape == (max_sentence_length, batch_size, e_word)
    assert jnp.allclose(out, ref, atol=2e-3, rtol=2e-3), "mismatch vs reference"

    print("KERNEL_OK")
</pallas_src>

<mosaic_0001>
module attributes {stable_mosaic.version = 11 : i64} {
  func.func @kernel(%arg0: i32, %arg1: memref<8x144xbf16, #tpu.memory_space<vmem>>, %arg2: memref<40x128xbf16, #tpu.memory_space<vmem>>, %arg3: memref<1x128xf32, #tpu.memory_space<vmem>>, %arg4: memref<8x128xf32, #tpu.memory_space<vmem>>) attributes {dimension_semantics = [#tpu.dimension_semantics<parallel>], iteration_bounds = array<i64: 1>, scalar_prefetch = 0 : i64, scratch_operands = 0 : i64, tpu.core_type = #tpu.core_type<tc>, window_params = [{transform_indices = @transform_0, window_bounds = array<i64: 8, 144>}, {pipeline_mode = #tpu.pipeline_mode<synchronous>, transform_indices = @transform_1, window_bounds = array<i64: 40, 128>}, {pipeline_mode = #tpu.pipeline_mode<synchronous>, transform_indices = @transform_2, window_bounds = array<i64: 1, 128>}, {transform_indices = @transform_3, window_bounds = array<i64: 8, 128>}]} {
    %c0 = arith.constant 0 : index
    %c0_0 = arith.constant 0 : index
    %0 = vector.load %arg2[%c0, %c0_0] : memref<40x128xbf16, #tpu.memory_space<vmem>>, vector<40x128xbf16>
    %c0_1 = arith.constant 0 : index
    %c0_2 = arith.constant 0 : index
    %1 = vector.load %arg1[%c0_1, %c0_2] : memref<8x144xbf16, #tpu.memory_space<vmem>>, vector<8x40xbf16>
    %cst = arith.constant dense<0.000000e+00> : vector<8x128xf32>
    %2 = tpu.matmul %1, %0, %cst {dimension_numbers = #tpu.dot_dimension_numbers<[1], [0], [0], [1], [0, 0, 1, 1], [], []>} : vector<8x40xbf16>, vector<40x128xbf16>, vector<8x128xf32> -> vector<8x128xf32>
    %c0_3 = arith.constant 0 : index
    %c8 = arith.constant 8 : index
    %3 = vector.load %arg1[%c0_3, %c8] : memref<8x144xbf16, #tpu.memory_space<vmem>>, vector<8x40xbf16>
    %cst_4 = arith.constant dense<0.000000e+00> : vector<8x128xf32>
    %4 = tpu.matmul %3, %0, %cst_4 {dimension_numbers = #tpu.dot_dimension_numbers<[1], [0], [0], [1], [0, 0, 1, 1], [], []>} : vector<8x40xbf16>, vector<40x128xbf16>, vector<8x128xf32> -> vector<8x128xf32>
    %5 = arith.maximumf %2, %4 : vector<8x128xf32>
    %c0_5 = arith.constant 0 : index
    %c16 = arith.constant 16 : index
    %6 = vector.load %arg1[%c0_5, %c16] : memref<8x144xbf16, #tpu.memory_space<vmem>>, vector<8x40xbf16>
    %cst_6 = arith.constant dense<0.000000e+00> : vector<8x128xf32>
    %7 = tpu.matmul %6, %0, %cst_6 {dimension_numbers = #tpu.dot_dimension_numbers<[1], [0], [0], [1], [0, 0, 1, 1], [], []>} : vector<8x40xbf16>, vector<40x128xbf16>, vector<8x128xf32> -> vector<8x128xf32>
    %8 = arith.maximumf %5, %7 : vector<8x128xf32>
    %c0_7 = arith.constant 0 : index
    %c24 = arith.constant 24 : index
    %9 = vector.load %arg1[%c0_7, %c24] : memref<8x144xbf16, #tpu.memory_space<vmem>>, vector<8x40xbf16>
    %cst_8 = arith.constant dense<0.000000e+00> : vector<8x128xf32>
    %10 = tpu.matmul %9, %0, %cst_8 {dimension_numbers = #tpu.dot_dimension_numbers<[1], [0], [0], [1], [0, 0, 1, 1], [], []>} : vector<8x40xbf16>, vector<40x128xbf16>, vector<8x128xf32> -> vector<8x128xf32>
    %11 = arith.maximumf %8, %10 : vector<8x128xf32>
    %c0_9 = arith.constant 0 : index
    %c32 = arith.constant 32 : index
    %12 = vector.load %arg1[%c0_9, %c32] : memref<8x144xbf16, #tpu.memory_space<vmem>>, vector<8x40xbf16>
    %cst_10 = arith.constant dense<0.000000e+00> : vector<8x128xf32>
    %13 = tpu.matmul %12, %0, %cst_10 {dimension_numbers = #tpu.dot_dimension_numbers<[1], [0], [0], [1], [0, 0, 1, 1], [], []>} : vector<8x40xbf16>, vector<40x128xbf16>, vector<8x128xf32> -> vector<8x128xf32>
    %14 = arith.maximumf %11, %13 : vector<8x128xf32>
    %c0_11 = arith.constant 0 : index
    %c40 = arith.constant 40 : index
    %15 = vector.load %arg1[%c0_11, %c40] : memref<8x144xbf16, #tpu.memory_space<vmem>>, vector<8x40xbf16>
    %cst_12 = arith.constant dense<0.000000e+00> : vector<8x128xf32>
    %16 = tpu.matmul %15, %0, %cst_12 {dimension_numbers = #tpu.dot_dimension_numbers<[1], [0], [0], [1], [0, 0, 1, 1], [], []>} : vector<8x40xbf16>, vector<40x128xbf16>, vector<8x128xf32> -> vector<8x128xf32>
    %17 = arith.maximumf %14, %16 : vector<8x128xf32>
    %c0_13 = arith.constant 0 : index
    %c48 = arith.constant 48 : index
    %18 = vector.load %arg1[%c0_13, %c48] : memref<8x144xbf16, #tpu.memory_space<vmem>>, vector<8x40xbf16>
    %cst_14 = arith.constant dense<0.000000e+00> : vector<8x128xf32>
    %19 = tpu.matmul %18, %0, %cst_14 {dimension_numbers = #tpu.dot_dimension_numbers<[1], [0], [0], [1], [0, 0, 1, 1], [], []>} : vector<8x40xbf16>, vector<40x128xbf16>, vector<8x128xf32> -> vector<8x128xf32>
    %20 = arith.maximumf %17, %19 : vector<8x128xf32>
    %c0_15 = arith.constant 0 : index
    %c56 = arith.constant 56 : index
    %21 = vector.load %arg1[%c0_15, %c56] : memref<8x144xbf16, #tpu.memory_space<vmem>>, vector<8x40xbf16>
    %cst_16 = arith.constant dense<0.000000e+00> : vector<8x128xf32>
    %22 = tpu.matmul %21, %0, %cst_16 {dimension_numbers = #tpu.dot_dimension_numbers<[1], [0], [0], [1], [0, 0, 1, 1], [], []>} : vector<8x40xbf16>, vector<40x128xbf16>, vector<8x128xf32> -> vector<8x128xf32>
    %23 = arith.maximumf %20, %22 : vector<8x128xf32>
    %c0_17 = arith.constant 0 : index
    %c64 = arith.constant 64 : index
    %24 = vector.load %arg1[%c0_17, %c64] : memref<8x144xbf16, #tpu.memory_space<vmem>>, vector<8x40xbf16>
    %cst_18 = arith.constant dense<0.000000e+00> : vector<8x128xf32>
    %25 = tpu.matmul %24, %0, %cst_18 {dimension_numbers = #tpu.dot_dimension_numbers<[1], [0], [0], [1], [0, 0, 1, 1], [], []>} : vector<8x40xbf16>, vector<40x128xbf16>, vector<8x128xf32> -> vector<8x128xf32>
    %26 = arith.maximumf %23, %25 : vector<8x128xf32>
    %c0_19 = arith.constant 0 : index
    %c72 = arith.constant 72 : index
    %27 = vector.load %arg1[%c0_19, %c72] : memref<8x144xbf16, #tpu.memory_space<vmem>>, vector<8x40xbf16>
    %cst_20 = arith.constant dense<0.000000e+00> : vector<8x128xf32>
    %28 = tpu.matmul %27, %0, %cst_20 {dimension_numbers = #tpu.dot_dimension_numbers<[1], [0], [0], [1], [0, 0, 1, 1], [], []>} : vector<8x40xbf16>, vector<40x128xbf16>, vector<8x128xf32> -> vector<8x128xf32>
    %29 = arith.maximumf %26, %28 : vector<8x128xf32>
    %c0_21 = arith.constant 0 : index
    %c80 = arith.constant 80 : index
    %30 = vector.load %arg1[%c0_21, %c80] : memref<8x144xbf16, #tpu.memory_space<vmem>>, vector<8x40xbf16>
    %cst_22 = arith.constant dense<0.000000e+00> : vector<8x128xf32>
    %31 = tpu.matmul %30, %0, %cst_22 {dimension_numbers = #tpu.dot_dimension_numbers<[1], [0], [0], [1], [0, 0, 1, 1], [], []>} : vector<8x40xbf16>, vector<40x128xbf16>, vector<8x128xf32> -> vector<8x128xf32>
    %32 = arith.maximumf %29, %31 : vector<8x128xf32>
    %c0_23 = arith.constant 0 : index
    %c88 = arith.constant 88 : index
    %33 = vector.load %arg1[%c0_23, %c88] : memref<8x144xbf16, #tpu.memory_space<vmem>>, vector<8x40xbf16>
    %cst_24 = arith.constant dense<0.000000e+00> : vector<8x128xf32>
    %34 = tpu.matmul %33, %0, %cst_24 {dimension_numbers = #tpu.dot_dimension_numbers<[1], [0], [0], [1], [0, 0, 1, 1], [], []>} : vector<8x40xbf16>, vector<40x128xbf16>, vector<8x128xf32> -> vector<8x128xf32>
    %35 = arith.maximumf %32, %34 : vector<8x128xf32>
    %c0_25 = arith.constant 0 : index
    %c96 = arith.constant 96 : index
    %36 = vector.load %arg1[%c0_25, %c96] : memref<8x144xbf16, #tpu.memory_space<vmem>>, vector<8x40xbf16>
    %cst_26 = arith.constant dense<0.000000e+00> : vector<8x128xf32>
    %37 = tpu.matmul %36, %0, %cst_26 {dimension_numbers = #tpu.dot_dimension_numbers<[1], [0], [0], [1], [0, 0, 1, 1], [], []>} : vector<8x40xbf16>, vector<40x128xbf16>, vector<8x128xf32> -> vector<8x128xf32>
    %38 = arith.maximumf %35, %37 : vector<8x128xf32>
    %c0_27 = arith.constant 0 : index
    %c104 = arith.constant 104 : index
    %39 = vector.load %arg1[%c0_27, %c104] : memref<8x144xbf16, #tpu.memory_space<vmem>>, vector<8x40xbf16>
    %cst_28 = arith.constant dense<0.000000e+00> : vector<8x128xf32>
    %40 = tpu.matmul %39, %0, %cst_28 {dimension_numbers = #tpu.dot_dimension_numbers<[1], [0], [0], [1], [0, 0, 1, 1], [], []>} : vector<8x40xbf16>, vector<40x128xbf16>, vector<8x128xf32> -> vector<8x128xf32>
    %41 = arith.maximumf %38, %40 : vector<8x128xf32>
    %c0_29 = arith.constant 0 : index
    %c0_30 = arith.constant 0 : index
    %42 = vector.load %arg3[%c0_29, %c0_30] : memref<1x128xf32, #tpu.memory_space<vmem>>, vector<1x128xf32>
    %43 = vector.broadcast %42 : vector<1x128xf32> to vector<8x128xf32>
    %44 = arith.addf %41, %43 : vector<8x128xf32>
    %cst_31 = arith.constant 0.000000e+00 : f32
    %45 = vector.broadcast %cst_31 : f32 to vector<8x128xf32>
    %46 = arith.maximumf %44, %45 : vector<8x128xf32>
    %c0_32 = arith.constant 0 : index
    %c0_33 = arith.constant 0 : index
    %47 = vector.load %arg4[%c0_32, %c0_33] : memref<8x128xf32, #tpu.memory_space<vmem>>, vector<8x128xf32>
    tpu.vector_store %arg4[%c0_32, %c0_33], %46 {strides = array<i32>} : memref<8x128xf32, #tpu.memory_space<vmem>>, vector<8x128xf32>,
    return
  }
  func.func @transform_0(%arg0: i32) -> (i32, i32) {
    %c0_i32 = arith.constant 0 : i32
    %c0_i32_0 = arith.constant 0 : i32
    return %arg0, %c0_i32 : i32, i32
  }
  func.func @transform_1(%arg0: i32) -> (i32, i32) {
    %c0_i32 = arith.constant 0 : i32
    %c0_i32_0 = arith.constant 0 : i32
    %c0_i32_1 = arith.constant 0 : i32
    return %c0_i32, %c0_i32_0 : i32, i32
  }
  func.func @transform_2(%arg0: i32) -> (i32, i32) {
    %c0_i32 = arith.constant 0 : i32
    %c0_i32_0 = arith.constant 0 : i32
    %c0_i32_1 = arith.constant 0 : i32
    return %c0_i32, %c0_i32_0 : i32, i32
  }
  func.func @transform_3(%arg0: i32) -> (i32, i32) {
    %c0_i32 = arith.constant 0 : i32
    %c0_i32_0 = arith.constant 0 : i32
    return %arg0, %c0_i32 : i32, i32
  }
}

</mosaic_0001>

<llo_original>
// kernel: cnn_forward.1
$region0: #{cnn_forward.1}
  #allocation0 [shape = 'u32[]', space=smem, size = 0x4, offset = 0x4, fixed_abs, tag = 'smem constant byte address 0x4 - core index']
  #allocation1 [shape = 'u32[144,128]{1,0:T(1,128)}', space=vmem, size = 0x12000, scoped, tag = 'internal scratch']
  %s0 = inlined_call_operand.vmem [shape: bf16[8,144], index: 0, kind: input, shape index: {}]
  %s1 = inlined_call_operand.vmem [shape: bf16[40,128], index: 1, kind: input, shape index: {}]
  %s2 = inlined_call_operand.vmem [shape: f32[1,128], index: 2, kind: input, shape index: {}]
  %s3 = inlined_call_operand.hbm [shape: f32[8,128], index: 3, kind: output, shape index: {}]
  %s4 = sld [smem:[#allocation0]]
  $region22: #{cnn_forward.1} parent=0
    _
  %s6 = ssub.s32 1, %s4
  %s7 = scalar_select 0, %s6, %s4
  $region1: #{cnn_forward.1} parent=0
    #allocation2 [shape = 'u8[4096]{0}', space=vmem, size = 0x1000, scoped, tag = 'output window, operand 0, single buffered']
    #allocation3 [shape = 's32[1]{0}', space=sflag, size = 0x4, scoped, tag = 'scoped memory for cnn_forward.1']
    %8 = vsyncpa [#allocation3], 0
    // Predicated region
    $region2: #{cnn_forward.1} parent=1 // pred_check
      _
    $region3: #{cnn_forward.1} parent=1 // pred_check_branch
      %10 = sbr.rel (0) target = $region5
    $region4: #{cnn_forward.1} parent=1 // pred_region
      _
    $region5: #{cnn_forward.1} parent=1 // pred_fallthru
      _
    // Predicated region
    $region6: #{cnn_forward.1} parent=1 // pred_check
      _
    $region7: #{cnn_forward.1} parent=1 // pred_check_branch
      %12 = sbr.rel (0) target = $region9
    $region8: #{cnn_forward.1} parent=1 // pred_region
      _
    $region9: #{cnn_forward.1} parent=1 // pred_fallthru
      _
    // Predicated region
    $region10: #{cnn_forward.1} parent=1 // pred_check
      _
    $region11: #{cnn_forward.1} parent=1 // pred_check_branch
      %14 = sbr.rel (0) target = $region13
    $region12: #{cnn_forward.1} parent=1 // pred_region
      _
    $region13: #{cnn_forward.1} parent=1 // pred_fallthru
      _
    %v16 = vld [vmem:[%s1] sm:$0xf]
    %v17 = vld [vmem:[%s1 + $0x4] sm:$0xf]
    %v18 = vld [vmem:[%s1 + $0x8] sm:$0xf]
    %v19 = vld [vmem:[%s1 + $0xc] sm:$0xf]
    %v20 = vld [vmem:[%s1 + $0x10] sm:$0xf]
    %v21 = vld [vmem:[%s0] sm:$0xf]
    %v27 = vunpack.c.l.b16 %v16
    %v28 = vunpack.c.l.b16 %v17
    %v29 = vunpack.c.l.b16 %v18
    %v30 = vunpack.c.l.b16 %v19
    %v31 = vunpack.c.l.b16 %v20
    %v32 = vpack.c.b16 %v28, %v27
    %v33 = vpack.c.b16 %v30, %v29
    %v34 = vpack.c.b16 %v31, %v31
    %vm37 = vcmask 326656
    %v39 = vsel %vm37, %v21, 0
    %vm41 = vcmask 1043456
    %v43 = vsel %vm41, %v34, 0
    %45 = vmatprep.subr.bf16.mxu0 0
    %46 = vmatpush1.bf16.msra.mxu0 %v32
    %47 = vmatprep.subr.bf16.mxu0 0
    %48 = vmatpush1.bf16.msra.mxu0 %v33
    %49 = vmatprep.subr.bf16.mxu0 0
    %50 = vmatpush1.bf16.msra.mxu0 %v43
    %51 = vmatprep.subr.bf16.mxu0 0
    %52 = vmatpush1.bf16.msra.mxu0 0
    %53 = vmatprep.subr.bf16.mxu0 0
    %54 = vmatpush1.bf16.msra.mxu0 0
    %55 = vmatprep.subr.bf16.mxu0 0
    %56 = vmatpush1.bf16.msra.mxu0 0
    %57 = vmatprep.subr.bf16.mxu0 0
    %58 = vmatpush1.bf16.msra.mxu0 0
    %59 = vmatprep.subr.bf16.mxu0 0
    %60 = vmatpush1.bf16.msra.mxu0 0
    %61 = vmatprep.subr.bf16.mxu0 0
    %62 = vmatpush1.bf16.msra.mxu0 0
    %63 = vmatprep.subr.bf16.mxu0 0
    %64 = vmatpush1.bf16.msra.mxu0 0
    %65 = vmatprep.subr.bf16.mxu0 0
    %66 = vmatpush1.bf16.msra.mxu0 0
    %67 = vmatprep.subr.bf16.mxu0 0
    %68 = vmatpush1.bf16.msra.mxu0 0
    %69 = vmatprep.subr.bf16.mxu0 0
    %70 = vmatpush1.bf16.msra.mxu0 0
    %71 = vmatprep.subr.bf16.mxu0 0
    %72 = vmatpush1.bf16.msra.mxu0 0
    %73 = vmatprep.subr.bf16.mxu0 0
    %74 = vmatpush1.bf16.msra.mxu0 0
    %75 = vmatprep.subr.bf16.mxu0 0
    %76 = vmatpush1.bf16.msra.mxu0 0
    %77 = vmatprep.mubr.bf16.mxu0 0
    %78 = vmatmul.mubr.bf16.gmra.mrb[0].mxu0 %v39
    %v79 = vpop.f32.mrb[0].mxu0
    %v80 = vadd.f32 0.0, %v79
    %v81 = vpop.f32.mrb[0].mxu0
    %v82 = vpop.f32.mrb[0].mxu0
    %v83 = vpop.f32.mrb[0].mxu0
    %84 = vdwg.mxu0
    %v86 = vunpack.c.l.b16 %v21
    %v87 = vpack.c.b16 %v86, %v86
    %88 = vrot.lane.b32.xlu0 %v87, 120
    %v89 = vpop.permute.xlu0 %88
    %v91 = vsel %vm37, %v89, 0
    %93 = vmatprep.subr.bf16.mxu0 0
    %94 = vmatpush1.bf16.msra.mxu0 %v32
    %95 = vmatprep.subr.bf16.mxu0 0
    %96 = vmatpush1.bf16.msra.mxu0 %v33
    %97 = vmatprep.subr.bf16.mxu0 0
    %98 = vmatpush1.bf16.msra.mxu0 %v43
    %99 = vmatprep.subr.bf16.mxu0 0
    %100 = vmatpush1.bf16.msra.mxu0 0
    %101 = vmatprep.subr.bf16.mxu0 0
    %102 = vmatpush1.bf16.msra.mxu0 0
    %103 = vmatprep.subr.bf16.mxu0 0
    %104 = vmatpush1.bf16.msra.mxu0 0
    %105 = vmatprep.subr.bf16.mxu0 0
    %106 = vmatpush1.bf16.msra.mxu0 0
    %107 = vmatprep.subr.bf16.mxu0 0
    %108 = vmatpush1.bf16.msra.mxu0 0
    %109 = vmatprep.subr.bf16.mxu0 0
    %110 = vmatpush1.bf16.msra.mxu0 0
    %111 = vmatprep.subr.bf16.mxu0 0
    %112 = vmatpush1.bf16.msra.mxu0 0
    %113 = vmatprep.subr.bf16.mxu0 0
    %114 = vmatpush1.bf16.msra.mxu0 0
    %115 = vmatprep.subr.bf16.mxu0 0
    %116 = vmatpush1.bf16.msra.mxu0 0
    %117 = vmatprep.subr.bf16.mxu0 0
    %118 = vmatpush1.bf16.msra.mxu0 0
    %119 = vmatprep.subr.bf16.mxu0 0
    %120 = vmatpush1.bf16.msra.mxu0 0
    %121 = vmatprep.subr.bf16.mxu0 0
    %122 = vmatpush1.bf16.msra.mxu0 0
    %123 = vmatprep.subr.bf16.mxu0 0
    %124 = vmatpush1.bf16.msra.mxu0 0
    %125 = vmatprep.mubr.bf16.mxu0 0
    %126 = vmatmul.mubr.bf16.gmra.mrb[0].mxu0 %v91
    %v127 = vpop.f32.mrb[0].mxu0
    %v128 = vadd.f32 0.0, %v127
    %v129 = vpop.f32.mrb[0].mxu0
    %v130 = vpop.f32.mrb[0].mxu0
    %v131 = vpop.f32.mrb[0].mxu0
    %132 = vdwg.mxu0
    %v133 = vmax.f32 %v80, %v128
    %134 = vrot.lane.b32.xlu0 %v87, 112
    %v135 = vpop.permute.xlu0 %134
    %v137 = vsel %vm37, %v135, 0
    %139 = vmatprep.subr.bf16.mxu0 0
    %140 = vmatpush1.bf16.msra.mxu0 %v32
    %141 = vmatprep.subr.bf16.mxu0 0
    %142 = vmatpush1.bf16.msra.mxu0 %v33
    %143 = vmatprep.subr.bf16.mxu0 0
    %144 = vmatpush1.bf16.msra.mxu0 %v43
    %145 = vmatprep.subr.bf16.mxu0 0
    %146 = vmatpush1.bf16.msra.mxu0 0
    %147 = vmatprep.subr.bf16.mxu0 0
    %148 = vmatpush1.bf16.msra.mxu0 0
    %149 = vmatprep.subr.bf16.mxu0 0
    %150 = vmatpush1.bf16.msra.mxu0 0
    %151 = vmatprep.subr.bf16.mxu0 0
    %152 = vmatpush1.bf16.msra.mxu0 0
    %153 = vmatprep.subr.bf16.mxu0 0
    %154 = vmatpush1.bf16.msra.mxu0 0
    %155 = vmatprep.subr.bf16.mxu0 0
    %156 = vmatpush1.bf16.msra.mxu0 0
    %157 = vmatprep.subr.bf16.mxu0 0
    %158 = vmatpush1.bf16.msra.mxu0 0
    %159 = vmatprep.subr.bf16.mxu0 0
    %160 = vmatpush1.bf16.msra.mxu0 0
    %161 = vmatprep.subr.bf16.mxu0 0
    %162 = vmatpush1.bf16.msra.mxu0 0
    %163 = vmatprep.subr.bf16.mxu0 0
    %164 = vmatpush1.bf16.msra.mxu0 0
    %165 = vmatprep.subr.bf16.mxu0 0
    %166 = vmatpush1.bf16.msra.mxu0 0
    %167 = vmatprep.subr.bf16.mxu0 0
    %168 = vmatpush1.bf16.msra.mxu0 0
    %169 = vmatprep.subr.bf16.mxu0 0
    %170 = vmatpush1.bf16.msra.mxu0 0
    %171 = vmatprep.mubr.bf16.mxu0 0
    %172 = vmatmul.mubr.bf16.gmra.mrb[0].mxu0 %v137
    %v173 = vpop.f32.mrb[0].mxu0
    %v174 = vadd.f32 0.0, %v173
    %v175 = vpop.f32.mrb[0].mxu0
    %v176 = vpop.f32.mrb[0].mxu0
    %v177 = vpop.f32.mrb[0].mxu0
    %178 = vdwg.mxu0
    %v179 = vmax.f32 %v133, %v174
    %180 = vrot.lane.b32.xlu0 %v87, 104
    %v181 = vpop.permute.xlu0 %180
    %v183 = vsel %vm37, %v181, 0
    %185 = vmatprep.subr.bf16.mxu0 0
    %186 = vmatpush1.bf16.msra.mxu0 %v32
    %187 = vmatprep.subr.bf16.mxu0 0
    %188 = vmatpush1.bf16.msra.mxu0 %v33
    %189 = vmatprep.subr.bf16.mxu0 0
    %190 = vmatpush1.bf16.msra.mxu0 %v43
    %191 = vmatprep.subr.bf16.mxu0 0
    %192 = vmatpush1.bf16.msra.mxu0 0
    %193 = vmatprep.subr.bf16.mxu0 0
    %194 = vmatpush1.bf16.msra.mxu0 0
    %195 = vmatprep.subr.bf16.mxu0 0
    %196 = vmatpush1.bf16.msra.mxu0 0
    %197 = vmatprep.subr.bf16.mxu0 0
    %198 = vmatpush1.bf16.msra.mxu0 0
    %199 = vmatprep.subr.bf16.mxu0 0
    %200 = vmatpush1.bf16.msra.mxu0 0
    %201 = vmatprep.subr.bf16.mxu0 0
    %202 = vmatpush1.bf16.msra.mxu0 0
    %203 = vmatprep.subr.bf16.mxu0 0
    %204 = vmatpush1.bf16.msra.mxu0 0
    %205 = vmatprep.subr.bf16.mxu0 0
    %206 = vmatpush1.bf16.msra.mxu0 0
    %207 = vmatprep.subr.bf16.mxu0 0
    %208 = vmatpush1.bf16.msra.mxu0 0
    %209 = vmatprep.subr.bf16.mxu0 0
    %210 = vmatpush1.bf16.msra.mxu0 0
    %211 = vmatprep.subr.bf16.mxu0 0
    %212 = vmatpush1.bf16.msra.mxu0 0
    %213 = vmatprep.subr.bf16.mxu0 0
    %214 = vmatpush1.bf16.msra.mxu0 0
    %215 = vmatprep.subr.bf16.mxu0 0
    %216 = vmatpush1.bf16.msra.mxu0 0
    %217 = vmatprep.mubr.bf16.mxu0 0
    %218 = vmatmul.mubr.bf16.gmra.mrb[0].mxu0 %v183
    %v219 = vpop.f32.mrb[0].mxu0
    %v220 = vadd.f32 0.0, %v219
    %v221 = vpop.f32.mrb[0].mxu0
    %v222 = vpop.f32.mrb[0].mxu0
    %v223 = vpop.f32.mrb[0].mxu0
    %224 = vdwg.mxu0
    %v225 = vmax.f32 %v179, %v220
    %226 = vrot.lane.b32.xlu0 %v87, 96
    %v227 = vpop.permute.xlu0 %226
    %v229 = vsel %vm37, %v227, 0
    %231 = vmatprep.subr.bf16.mxu0 0
    %232 = vmatpush1.bf16.msra.mxu0 %v32
    %233 = vmatprep.subr.bf16.mxu0 0
    %234 = vmatpush1.bf16.msra.mxu0 %v33
    %235 = vmatprep.subr.bf16.mxu0 0
    %236 = vmatpush1.bf16.msra.mxu0 %v43
    %237 = vmatprep.subr.bf16.mxu0 0
    %238 = vmatpush1.bf16.msra.mxu0 0
    %239 = vmatprep.subr.bf16.mxu0 0
    %240 = vmatpush1.bf16.msra.mxu0 0
    %241 = vmatprep.subr.bf16.mxu0 0
    %242 = vmatpush1.bf16.msra.mxu0 0
    %243 = vmatprep.subr.bf16.mxu0 0
    %244 = vmatpush1.bf16.msra.mxu0 0
    %245 = vmatprep.subr.bf16.mxu0 0
    %246 = vmatpush1.bf16.msra.mxu0 0
    %247 = vmatprep.subr.bf16.mxu0 0
    %248 = vmatpush1.bf16.msra.mxu0 0
    %249 = vmatprep.subr.bf16.mxu0 0
    %250 = vmatpush1.bf16.msra.mxu0 0
    %251 = vmatprep.subr.bf16.mxu0 0
    %252 = vmatpush1.bf16.msra.mxu0 0
    %253 = vmatprep.subr.bf16.mxu0 0
    %254 = vmatpush1.bf16.msra.mxu0 0
    %255 = vmatprep.subr.bf16.mxu0 0
    %256 = vmatpush1.bf16.msra.mxu0 0
    %257 = vmatprep.subr.bf16.mxu0 0
    %258 = vmatpush1.bf16.msra.mxu0 0
    %259 = vmatprep.subr.bf16.mxu0 0
    %260 = vmatpush1.bf16.msra.mxu0 0
    %261 = vmatprep.subr.bf16.mxu0 0
    %262 = vmatpush1.bf16.msra.mxu0 0
    %263 = vmatprep.mubr.bf16.mxu0 0
    %264 = vmatmul.mubr.bf16.gmra.mrb[0].mxu0 %v229
    %v265 = vpop.f32.mrb[0].mxu0
    %v266 = vadd.f32 0.0, %v265
    %v267 = vpop.f32.mrb[0].mxu0
    %v268 = vpop.f32.mrb[0].mxu0
    %v269 = vpop.f32.mrb[0].mxu0
    %270 = vdwg.mxu0
    %v271 = vmax.f32 %v225, %v266
    %272 = vrot.lane.b32.xlu0 %v87, 88
    %v273 = vpop.permute.xlu0 %272
    %v275 = vsel %vm37, %v273, 0
    %277 = vmatprep.subr.bf16.mxu0 0
    %278 = vmatpush1.bf16.msra.mxu0 %v32
    %279 = vmatprep.subr.bf16.mxu0 0
    %280 = vmatpush1.bf16.msra.mxu0 %v33
    %281 = vmatprep.subr.bf16.mxu0 0
    %282 = vmatpush1.bf16.msra.mxu0 %v43
    %283 = vmatprep.subr.bf16.mxu0 0
    %284 = vmatpush1.bf16.msra.mxu0 0
    %285 = vmatprep.subr.bf16.mxu0 0
    %286 = vmatpush1.bf16.msra.mxu0 0
    %287 = vmatprep.subr.bf16.mxu0 0
    %288 = vmatpush1.bf16.msra.mxu0 0
    %289 = vmatprep.subr.bf16.mxu0 0
    %290 = vmatpush1.bf16.msra.mxu0 0
    %291 = vmatprep.subr.bf16.mxu0 0
    %292 = vmatpush1.bf16.msra.mxu0 0
    %293 = vmatprep.subr.bf16.mxu0 0
    %294 = vmatpush1.bf16.msra.mxu0 0
    %295 = vmatprep.subr.bf16.mxu0 0
    %296 = vmatpush1.bf16.msra.mxu0 0
    %297 = vmatprep.subr.bf16.mxu0 0
    %298 = vmatpush1.bf16.msra.mxu0 0
    %299 = vmatprep.subr.bf16.mxu0 0
    %300 = vmatpush1.bf16.msra.mxu0 0
    %301 = vmatprep.subr.bf16.mxu0 0
    %302 = vmatpush1.bf16.msra.mxu0 0
    %303 = vmatprep.subr.bf16.mxu0 0
    %304 = vmatpush1.bf16.msra.mxu0 0
    %305 = vmatprep.subr.bf16.mxu0 0
    %306 = vmatpush1.bf16.msra.mxu0 0
    %307 = vmatprep.subr.bf16.mxu0 0
    %308 = vmatpush1.bf16.msra.mxu0 0
    %309 = vmatprep.mubr.bf16.mxu0 0
    %310 = vmatmul.mubr.bf16.gmra.mrb[0].mxu0 %v275
    %v311 = vpop.f32.mrb[0].mxu0
    %v312 = vadd.f32 0.0, %v311
    %v313 = vpop.f32.mrb[0].mxu0
    %v314 = vpop.f32.mrb[0].mxu0
    %v315 = vpop.f32.mrb[0].mxu0
    %316 = vdwg.mxu0
    %v317 = vmax.f32 %v271, %v312
    %318 = vrot.lane.b32.xlu0 %v87, 80
    %v319 = vpop.permute.xlu0 %318
    %v321 = vsel %vm37, %v319, 0
    %323 = vmatprep.subr.bf16.mxu0 0
    %324 = vmatpush1.bf16.msra.mxu0 %v32
    %325 = vmatprep.subr.bf16.mxu0 0
    %326 = vmatpush1.bf16.msra.mxu0 %v33
    %327 = vmatprep.subr.bf16.mxu0 0
    %328 = vmatpush1.bf16.msra.mxu0 %v43
    %329 = vmatprep.subr.bf16.mxu0 0
    %330 = vmatpush1.bf16.msra.mxu0 0
    %331 = vmatprep.subr.bf16.mxu0 0
    %332 = vmatpush1.bf16.msra.mxu0 0
    %333 = vmatprep.subr.bf16.mxu0 0
    %334 = vmatpush1.bf16.msra.mxu0 0
    %335 = vmatprep.subr.bf16.mxu0 0
    %336 = vmatpush1.bf16.msra.mxu0 0
    %337 = vmatprep.subr.bf16.mxu0 0
    %338 = vmatpush1.bf16.msra.mxu0 0
    %339 = vmatprep.subr.bf16.mxu0 0
    %340 = vmatpush1.bf16.msra.mxu0 0
    %341 = vmatprep.subr.bf16.mxu0 0
    %342 = vmatpush1.bf16.msra.mxu0 0
    %343 = vmatprep.subr.bf16.mxu0 0
    %344 = vmatpush1.bf16.msra.mxu0 0
    %345 = vmatprep.subr.bf16.mxu0 0
    %346 = vmatpush1.bf16.msra.mxu0 0
    %347 = vmatprep.subr.bf16.mxu0 0
    %348 = vmatpush1.bf16.msra.mxu0 0
    %349 = vmatprep.subr.bf16.mxu0 0
    %350 = vmatpush1.bf16.msra.mxu0 0
    %351 = vmatprep.subr.bf16.mxu0 0
    %352 = vmatpush1.bf16.msra.mxu0 0
    %353 = vmatprep.subr.bf16.mxu0 0
    %354 = vmatpush1.bf16.msra.mxu0 0
    %355 = vmatprep.mubr.bf16.mxu0 0
    %356 = vmatmul.mubr.bf16.gmra.mrb[0].mxu0 %v321
    %v357 = vpop.f32.mrb[0].mxu0
    %v358 = vadd.f32 0.0, %v357
    %v359 = vpop.f32.mrb[0].mxu0
    %v360 = vpop.f32.mrb[0].mxu0
    %v361 = vpop.f32.mrb[0].mxu0
    %362 = vdwg.mxu0
    %v363 = vmax.f32 %v317, %v358
    %364 = vrot.lane.b32.xlu0 %v87, 72
    %v365 = vpop.permute.xlu0 %364
    %v367 = vsel %vm37, %v365, 0
    %369 = vmatprep.subr.bf16.mxu0 0
    %370 = vmatpush1.bf16.msra.mxu0 %v32
    %371 = vmatprep.subr.bf16.mxu0 0
    %372 = vmatpush1.bf16.msra.mxu0 %v33
    %373 = vmatprep.subr.bf16.mxu0 0
    %374 = vmatpush1.bf16.msra.mxu0 %v43
    %375 = vmatprep.subr.bf16.mxu0 0
    %376 = vmatpush1.bf16.msra.mxu0 0
    %377 = vmatprep.subr.bf16.mxu0 0
    %378 = vmatpush1.bf16.msra.mxu0 0
    %379 = vmatprep.subr.bf16.mxu0 0
    %380 = vmatpush1.bf16.msra.mxu0 0
    %381 = vmatprep.subr.bf16.mxu0 0
    %382 = vmatpush1.bf16.msra.mxu0 0
    %383 = vmatprep.subr.bf16.mxu0 0
    %384 = vmatpush1.bf16.msra.mxu0 0
    %385 = vmatprep.subr.bf16.mxu0 0
    %386 = vmatpush1.bf16.msra.mxu0 0
    %387 = vmatprep.subr.bf16.mxu0 0
    %388 = vmatpush1.bf16.msra.mxu0 0
    %389 = vmatprep.subr.bf16.mxu0 0
    %390 = vmatpush1.bf16.msra.mxu0 0
    %391 = vmatprep.subr.bf16.mxu0 0
    %392 = vmatpush1.bf16.msra.mxu0 0
    %393 = vmatprep.subr.bf16.mxu0 0
    %394 = vmatpush1.bf16.msra.mxu0 0
    %395 = vmatprep.subr.bf16.mxu0 0
    %396 = vmatpush1.bf16.msra.mxu0 0
    %397 = vmatprep.subr.bf16.mxu0 0
    %398 = vmatpush1.bf16.msra.mxu0 0
    %399 = vmatprep.subr.bf16.mxu0 0
    %400 = vmatpush1.bf16.msra.mxu0 0
    %401 = vmatprep.mubr.bf16.mxu0 0
    %402 = vmatmul.mubr.bf16.gmra.mrb[0].mxu0 %v367
    %v403 = vpop.f32.mrb[0].mxu0
    %v404 = vadd.f32 0.0, %v403
    %v405 = vpop.f32.mrb[0].mxu0
    %v406 = vpop.f32.mrb[0].mxu0
    %v407 = vpop.f32.mrb[0].mxu0
    %408 = vdwg.mxu0
    %v409 = vmax.f32 %v363, %v404
    %410 = vrot.lane.b32.xlu0 %v87, 64
    %v411 = vpop.permute.xlu0 %410
    %v413 = vsel %vm37, %v411, 0
    %415 = vmatprep.subr.bf16.mxu0 0
    %416 = vmatpush1.bf16.msra.mxu0 %v32
    %417 = vmatprep.subr.bf16.mxu0 0
    %418 = vmatpush1.bf16.msra.mxu0 %v33
    %419 = vmatprep.subr.bf16.mxu0 0
    %420 = vmatpush1.bf16.msra.mxu0 %v43
    %421 = vmatprep.subr.bf16.mxu0 0
    %422 = vmatpush1.bf16.msra.mxu0 0
    %423 = vmatprep.subr.bf16.mxu0 0
    %424 = vmatpush1.bf16.msra.mxu0 0
    %425 = vmatprep.subr.bf16.mxu0 0
    %426 = vmatpush1.bf16.msra.mxu0 0
    %427 = vmatprep.subr.bf16.mxu0 0
    %428 = vmatpush1.bf16.msra.mxu0 0
    %429 = vmatprep.subr.bf16.mxu0 0
    %430 = vmatpush1.bf16.msra.mxu0 0
    %431 = vmatprep.subr.bf16.mxu0 0
    %432 = vmatpush1.bf16.msra.mxu0 0
    %433 = vmatprep.subr.bf16.mxu0 0
    %434 = vmatpush1.bf16.msra.mxu0 0
    %435 = vmatprep.subr.bf16.mxu0 0
    %436 = vmatpush1.bf16.msra.mxu0 0
    %437 = vmatprep.subr.bf16.mxu0 0
    %438 = vmatpush1.bf16.msra.mxu0 0
    %439 = vmatprep.subr.bf16.mxu0 0
    %440 = vmatpush1.bf16.msra.mxu0 0
    %441 = vmatprep.subr.bf16.mxu0 0
    %442 = vmatpush1.bf16.msra.mxu0 0
    %443 = vmatprep.subr.bf16.mxu0 0
    %444 = vmatpush1.bf16.msra.mxu0 0
    %445 = vmatprep.subr.bf16.mxu0 0
    %446 = vmatpush1.bf16.msra.mxu0 0
    %447 = vmatprep.mubr.bf16.mxu0 0
    %448 = vmatmul.mubr.bf16.gmra.mrb[0].mxu0 %v413
    %v449 = vpop.f32.mrb[0].mxu0
    %v450 = vadd.f32 0.0, %v449
    %v451 = vpop.f32.mrb[0].mxu0
    %v452 = vpop.f32.mrb[0].mxu0
    %v453 = vpop.f32.mrb[0].mxu0
    %454 = vdwg.mxu0
    %v455 = vmax.f32 %v409, %v450
    %456 = vrot.lane.b32.xlu0 %v87, 56
    %v457 = vpop.permute.xlu0 %456
    %v459 = vsel %vm37, %v457, 0
    %461 = vmatprep.subr.bf16.mxu0 0
    %462 = vmatpush1.bf16.msra.mxu0 %v32
    %463 = vmatprep.subr.bf16.mxu0 0
    %464 = vmatpush1.bf16.msra.mxu0 %v33
    %465 = vmatprep.subr.bf16.mxu0 0
    %466 = vmatpush1.bf16.msra.mxu0 %v43
    %467 = vmatprep.subr.bf16.mxu0 0
    %468 = vmatpush1.bf16.msra.mxu0 0
    %469 = vmatprep.subr.bf16.mxu0 0
    %470 = vmatpush1.bf16.msra.mxu0 0
    %471 = vmatprep.subr.bf16.mxu0 0
    %472 = vmatpush1.bf16.msra.mxu0 0
    %473 = vmatprep.subr.bf16.mxu0 0
    %474 = vmatpush1.bf16.msra.mxu0 0
    %475 = vmatprep.subr.bf16.mxu0 0
    %476 = vmatpush1.bf16.msra.mxu0 0
    %477 = vmatprep.subr.bf16.mxu0 0
    %478 = vmatpush1.bf16.msra.mxu0 0
    %479 = vmatprep.subr.bf16.mxu0 0
    %480 = vmatpush1.bf16.msra.mxu0 0
    %481 = vmatprep.subr.bf16.mxu0 0
    %482 = vmatpush1.bf16.msra.mxu0 0
    %483 = vmatprep.subr.bf16.mxu0 0
    %484 = vmatpush1.bf16.msra.mxu0 0
    %485 = vmatprep.subr.bf16.mxu0 0
    %486 = vmatpush1.bf16.msra.mxu0 0
    %487 = vmatprep.subr.bf16.mxu0 0
    %488 = vmatpush1.bf16.msra.mxu0 0
    %489 = vmatprep.subr.bf16.mxu0 0
    %490 = vmatpush1.bf16.msra.mxu0 0
    %491 = vmatprep.subr.bf16.mxu0 0
    %492 = vmatpush1.bf16.msra.mxu0 0
    %493 = vmatprep.mubr.bf16.mxu0 0
    %494 = vmatmul.mubr.bf16.gmra.mrb[0].mxu0 %v459
    %v495 = vpop.f32.mrb[0].mxu0
    %v496 = vadd.f32 0.0, %v495
    %v497 = vpop.f32.mrb[0].mxu0
    %v498 = vpop.f32.mrb[0].mxu0
    %v499 = vpop.f32.mrb[0].mxu0
    %500 = vdwg.mxu0
    %v501 = vmax.f32 %v455, %v496
    %502 = vrot.lane.b32.xlu0 %v87, 48
    %v503 = vpop.permute.xlu0 %502
    %v505 = vsel %vm37, %v503, 0
    %507 = vmatprep.subr.bf16.mxu0 0
    %508 = vmatpush1.bf16.msra.mxu0 %v32
    %509 = vmatprep.subr.bf16.mxu0 0
    %510 = vmatpush1.bf16.msra.mxu0 %v33
    %511 = vmatprep.subr.bf16.mxu0 0
    %512 = vmatpush1.bf16.msra.mxu0 %v43
    %513 = vmatprep.subr.bf16.mxu0 0
    %514 = vmatpush1.bf16.msra.mxu0 0
    %515 = vmatprep.subr.bf16.mxu0 0
    %516 = vmatpush1.bf16.msra.mxu0 0
    %517 = vmatprep.subr.bf16.mxu0 0
    %518 = vmatpush1.bf16.msra.mxu0 0
    %519 = vmatprep.subr.bf16.mxu0 0
    %520 = vmatpush1.bf16.msra.mxu0 0
    %521 = vmatprep.subr.bf16.mxu0 0
    %522 = vmatpush1.bf16.msra.mxu0 0
    %523 = vmatprep.subr.bf16.mxu0 0
    %524 = vmatpush1.bf16.msra.mxu0 0
    %525 = vmatprep.subr.bf16.mxu0 0
    %526 = vmatpush1.bf16.msra.mxu0 0
    %527 = vmatprep.subr.bf16.mxu0 0
    %528 = vmatpush1.bf16.msra.mxu0 0
    %529 = vmatprep.subr.bf16.mxu0 0
    %530 = vmatpush1.bf16.msra.mxu0 0
    %531 = vmatprep.subr.bf16.mxu0 0
    %532 = vmatpush1.bf16.msra.mxu0 0
    %533 = vmatprep.subr.bf16.mxu0 0
    %534 = vmatpush1.bf16.msra.mxu0 0
    %535 = vmatprep.subr.bf16.mxu0 0
    %536 = vmatpush1.bf16.msra.mxu0 0
    %537 = vmatprep.subr.bf16.mxu0 0
    %538 = vmatpush1.bf16.msra.mxu0 0
    %539 = vmatprep.mubr.bf16.mxu0 0
    %540 = vmatmul.mubr.bf16.gmra.mrb[0].mxu0 %v505
    %v541 = vpop.f32.mrb[0].mxu0
    %v542 = vadd.f32 0.0, %v541
    %v543 = vpop.f32.mrb[0].mxu0
    %v544 = vpop.f32.mrb[0].mxu0
    %v545 = vpop.f32.mrb[0].mxu0
    %546 = vdwg.mxu0
    %v547 = vmax.f32 %v501, %v542
    %548 = vrot.lane.b32.xlu0 %v87, 40
    %v549 = vpop.permute.xlu0 %548
    %v551 = vsel %vm37, %v549, 0
    %553 = vmatprep.subr.bf16.mxu0 0
    %554 = vmatpush1.bf16.msra.mxu0 %v32
    %555 = vmatprep.subr.bf16.mxu0 0
    %556 = vmatpush1.bf16.msra.mxu0 %v33
    %557 = vmatprep.subr.bf16.mxu0 0
    %558 = vmatpush1.bf16.msra.mxu0 %v43
    %559 = vmatprep.subr.bf16.mxu0 0
    %560 = vmatpush1.bf16.msra.mxu0 0
    %561 = vmatprep.subr.bf16.mxu0 0
    %562 = vmatpush1.bf16.msra.mxu0 0
    %563 = vmatprep.subr.bf16.mxu0 0
    %564 = vmatpush1.bf16.msra.mxu0 0
    %565 = vmatprep.subr.bf16.mxu0 0
    %566 = vmatpush1.bf16.msra.mxu0 0
    %567 = vmatprep.subr.bf16.mxu0 0
    %568 = vmatpush1.bf16.msra.mxu0 0
    %569 = vmatprep.subr.bf16.mxu0 0
    %570 = vmatpush1.bf16.msra.mxu0 0
    %571 = vmatprep.subr.bf16.mxu0 0
    %572 = vmatpush1.bf16.msra.mxu0 0
    %573 = vmatprep.subr.bf16.mxu0 0
    %574 = vmatpush1.bf16.msra.mxu0 0
    %575 = vmatprep.subr.bf16.mxu0 0
    %576 = vmatpush1.bf16.msra.mxu0 0
    %577 = vmatprep.subr.bf16.mxu0 0
    %578 = vmatpush1.bf16.msra.mxu0 0
    %579 = vmatprep.subr.bf16.mxu0 0
    %580 = vmatpush1.bf16.msra.mxu0 0
    %581 = vmatprep.subr.bf16.mxu0 0
    %582 = vmatpush1.bf16.msra.mxu0 0
    %583 = vmatprep.subr.bf16.mxu0 0
    %584 = vmatpush1.bf16.msra.mxu0 0
    %585 = vmatprep.mubr.bf16.mxu0 0
    %586 = vmatmul.mubr.bf16.gmra.mrb[0].mxu0 %v551
    %v587 = vpop.f32.mrb[0].mxu0
    %v588 = vadd.f32 0.0, %v587
    %v589 = vpop.f32.mrb[0].mxu0
    %v590 = vpop.f32.mrb[0].mxu0
    %v591 = vpop.f32.mrb[0].mxu0
    %592 = vdwg.mxu0
    %v593 = vmax.f32 %v547, %v588
    %v594 = vld [vmem:[%s0] sm:$0xff]
    %v596 = vunpack.c.l.b16 %v594
    %v597 = vunpack.c.h.b16 %v594
    %v598 = vpack.c.b16 %v596, %v596
    %v599 = vpack.c.b16 %v597, %v597
    %600 = vrot.lane.b32.xlu0 %v598, 32
    %v601 = vpop.permute.xlu0 %600
    %602 = vrot.lane.b32.xlu0 %v599, 32
    %v603 = vpop.permute.xlu0 %602
    %vm604 = vcmask 261120
    %v605 = vsel %vm604, %v601, %v603
    %v607 = vsel %vm37, %v605, 0
    %609 = vmatprep.subr.bf16.mxu0 0
    %610 = vmatpush1.bf16.msra.mxu0 %v32
    %611 = vmatprep.subr.bf16.mxu0 0
    %612 = vmatpush1.bf16.msra.mxu0 %v33
    %613 = vmatprep.subr.bf16.mxu0 0
    %614 = vmatpush1.bf16.msra.mxu0 %v43
    %615 = vmatprep.subr.bf16.mxu0 0
    %616 = vmatpush1.bf16.msra.mxu0 0
    %617 = vmatprep.subr.bf16.mxu0 0
    %618 = vmatpush1.bf16.msra.mxu0 0
    %619 = vmatprep.subr.bf16.mxu0 0
    %620 = vmatpush1.bf16.msra.mxu0 0
    %621 = vmatprep.subr.bf16.mxu0 0
    %622 = vmatpush1.bf16.msra.mxu0 0
    %623 = vmatprep.subr.bf16.mxu0 0
    %624 = vmatpush1.bf16.msra.mxu0 0
    %625 = vmatprep.subr.bf16.mxu0 0
    %626 = vmatpush1.bf16.msra.mxu0 0
    %627 = vmatprep.subr.bf16.mxu0 0
    %628 = vmatpush1.bf16.msra.mxu0 0
    %629 = vmatprep.subr.bf16.mxu0 0
    %630 = vmatpush1.bf16.msra.mxu0 0
    %631 = vmatprep.subr.bf16.mxu0 0
    %632 = vmatpush1.bf16.msra.mxu0 0
    %633 = vmatprep.subr.bf16.mxu0 0
    %634 = vmatpush1.bf16.msra.mxu0 0
    %635 = vmatprep.subr.bf16.mxu0 0
    %636 = vmatpush1.bf16.msra.mxu0 0
    %637 = vmatprep.subr.bf16.mxu0 0
    %638 = vmatpush1.bf16.msra.mxu0 0
    %639 = vmatprep.subr.bf16.mxu0 0
    %640 = vmatpush1.bf16.msra.mxu0 0
    %641 = vmatprep.mubr.bf16.mxu0 0
    %642 = vmatmul.mubr.bf16.gmra.mrb[0].mxu0 %v607
    %v643 = vpop.f32.mrb[0].mxu0
    %v644 = vadd.f32 0.0, %v643
    %v645 = vpop.f32.mrb[0].mxu0
    %v646 = vpop.f32.mrb[0].mxu0
    %v647 = vpop.f32.mrb[0].mxu0
    %648 = vdwg.mxu0
    %v649 = vmax.f32 %v593, %v644
    %650 = vrot.lane.b32.xlu0 %v598, 24
    %v651 = vpop.permute.xlu0 %650
    %652 = vrot.lane.b32.xlu0 %v599, 24
    %v653 = vpop.permute.xlu0 %652
    %vm654 = vcmask 195584
    %v655 = vsel %vm654, %v651, %v653
    %v657 = vsel %vm37, %v655, 0
    %659 = vmatprep.subr.bf16.mxu0 0
    %660 = vmatpush1.bf16.msra.mxu0 %v32
    %661 = vmatprep.subr.bf16.mxu0 0
    %662 = vmatpush1.bf16.msra.mxu0 %v33
    %663 = vmatprep.subr.bf16.mxu0 0
    %664 = vmatpush1.bf16.msra.mxu0 %v43
    %665 = vmatprep.subr.bf16.mxu0 0
    %666 = vmatpush1.bf16.msra.mxu0 0
    %667 = vmatprep.subr.bf16.mxu0 0
    %668 = vmatpush1.bf16.msra.mxu0 0
    %669 = vmatprep.subr.bf16.mxu0 0
    %670 = vmatpush1.bf16.msra.mxu0 0
    %671 = vmatprep.subr.bf16.mxu0 0
    %672 = vmatpush1.bf16.msra.mxu0 0
    %673 = vmatprep.subr.bf16.mxu0 0
    %674 = vmatpush1.bf16.msra.mxu0 0
    %675 = vmatprep.subr.bf16.mxu0 0
    %676 = vmatpush1.bf16.msra.mxu0 0
    %677 = vmatprep.subr.bf16.mxu0 0
    %678 = vmatpush1.bf16.msra.mxu0 0
    %679 = vmatprep.subr.bf16.mxu0 0
    %680 = vmatpush1.bf16.msra.mxu0 0
    %681 = vmatprep.subr.bf16.mxu0 0
    %682 = vmatpush1.bf16.msra.mxu0 0
    %683 = vmatprep.subr.bf16.mxu0 0
    %684 = vmatpush1.bf16.msra.mxu0 0
    %685 = vmatprep.subr.bf16.mxu0 0
    %686 = vmatpush1.bf16.msra.mxu0 0
    %687 = vmatprep.subr.bf16.mxu0 0
    %688 = vmatpush1.bf16.msra.mxu0 0
    %689 = vmatprep.subr.bf16.mxu0 0
    %690 = vmatpush1.bf16.msra.mxu0 0
    %691 = vmatprep.mubr.bf16.mxu0 0
    %692 = vmatmul.mubr.bf16.gmra.mrb[0].mxu0 %v657
    %v693 = vpop.f32.mrb[0].mxu0
    %v694 = vadd.f32 0.0, %v693
    %v695 = vpop.f32.mrb[0].mxu0
    %v696 = vpop.f32.mrb[0].mxu0
    %v697 = vpop.f32.mrb[0].mxu0
    %698 = vdwg.mxu0
    %v699 = vmax.f32 %v649, %v694
    %v700 = vld [vmem:[%s2] sm:$0x1]
    %v702 = vlaneseq
    %v703 = vshrl.u32 %v702, 7
    %v704 = vsub.s32 0, %v703
    %v705 = vrot.slane %v700, %v704
    %v707 = vadd.f32 %v699, %v705
    %v708 = vmax.f32 %v707, 0.0
    %709 = vst [vmem:[#allocation2] sm:$0xff] %v708
    // Predicated region
    $region14: #{cnn_forward.1} parent=1 // pred_check
      _
    $region15: #{cnn_forward.1} parent=1 // pred_check_branch
      %711 = sbr.rel (0) target = $region17
    $region16: #{cnn_forward.1} parent=1 // pred_region
      %s713 = ssub.s32 128, 128
      %714 = vsyncadd [#allocation3], %s713
      %s716 = sshll.u32 [#allocation2], 4
      %s717 = int_to_ptr.vmem [resolvable:$true] %s716
      %719 = dma.vmem_to_hbm [thread:$0]  %s717, 128, %s3, [#allocation3]
    $region17: #{cnn_forward.1} parent=1 // pred_fallthru
      _
    // Predicated region
    $region18: #{cnn_forward.1} parent=1 // pred_check
      _
    $region19: #{cnn_forward.1} parent=1 // pred_check_branch
      %721 = sbr.rel (0) target = $region21
    $region20: #{cnn_forward.1} parent=1 // pred_region
      %722 = dma.done [#allocation3], 128
    $region21: #{cnn_forward.1} parent=1 // pred_fallthru
      _
    %723 = vsyncpa [#allocation3], 1

</llo_original>
